<compile_context>
chip_gen: v5e
topology: v5e:2x2
jax: 0.10.0
libtpu: 0.0.40
codegen_flags: <defaults>
</compile_context>

<pallas_src>
import functools

import jax
import jax.numpy as jnp
import numpy as np
from jax.experimental import pallas as pl
from jax.experimental.pallas import tpu as pltpu

_EPS = 1e-5


def _make_kernel(gb, ep):
    """Kernel over one block of `gb` graphs, each padded to `ep` rows."""

    def kernel(
        cnt_ref,          # [G_pad] int32 in SMEM (scalar prefetch): rows per graph
        x_ref,            # [1, GB*EP, C0] bf16  packed edge features of GB graphs
        w1_ref, b1_ref,   # [C0, C1] bf16, [1, C1] f32
        w2_ref, b2_ref,   # [C1, C2] bf16, [1, C2] f32
        w3t_ref, b3_ref,  # [1, C2]  bf16, [1, 1]  f32
        o_ref,            # [1, 1, GB*EP] f32  lane-dense logits for this block
    ):
        base = pl.program_id(0) * gb
        x = x_ref[0]                                                # [R, C0] bf16

        # Per-graph validity masks / inverse counts, built once and reused by
        # both InstanceNorm layers (Dropout(0.5) is identity in eval mode).
        row_ids = jax.lax.broadcasted_iota(jnp.int32, (ep, 1), 0)   # [EP, 1]
        masks, inv_cnts = [], []
        for g in range(gb):
            c = cnt_ref[base + g]
            masks.append((row_ids < c).astype(jnp.float32))         # [EP, 1]
            inv_cnts.append(1.0 / jnp.maximum(c.astype(jnp.float32), 1.0))

        def inorm_relu(h):
            # Per-graph InstanceNorm (affine=False, biased variance) + ReLU on
            # static, sublane-aligned slices of the packed [R, C] activation.
            pieces = []
            for g in range(gb):
                hg = h[g * ep:(g + 1) * ep, :]                       # [EP, C]
                hm = hg * masks[g]                                   # pads -> 0
                mean = jnp.sum(hm, axis=0, keepdims=True) * inv_cnts[g]
                var = jnp.sum(hm * hg, axis=0, keepdims=True) * inv_cnts[g]
                var = jnp.maximum(var - mean * mean, 0.0)            # fp clamp
                pieces.append(
                    jnp.maximum((hg - mean) * jax.lax.rsqrt(var + _EPS), 0.0))
            return pieces[0] if gb == 1 else jnp.concatenate(pieces, axis=0)

        h1 = jnp.dot(x, w1_ref[...], preferred_element_type=jnp.float32)
        h1 = inorm_relu(h1 + b1_ref[...])                            # [R, C1] f32
        h2 = jnp.dot(h1.astype(jnp.bfloat16), w2_ref[...],
                     preferred_element_type=jnp.float32)
        h2 = inorm_relu(h2 + b2_ref[...])                            # [R, C2] f32
        # Lane-dense final projection: (1, C2) x (R, C2) contracted on C2 -> (1, R).
        out = jax.lax.dot_general(
            w3t_ref[...], h2.astype(jnp.bfloat16),
            dimension_numbers=(((1,), (1,)), ((), ())),
            preferred_element_type=jnp.float32) + b3_ref[...]
        o_ref[0] = out

    return kernel


def _run_mlp_kernel(x_blk, counts, params, *, gb, ep):
    """x_blk: [NB, GB*EP, C0] bf16, counts: [NB*GB] int32 (clamped to EP)."""
    nb, r, c0 = x_blk.shape
    c1 = params["w1"].shape[1]
    c2 = params["w2"].shape[1]

    w1 = params["w1"].astype(jnp.bfloat16)
    w2 = params["w2"].astype(jnp.bfloat16)
    w3t = params["w3"].T.astype(jnp.bfloat16)              # [1, C2]
    b1 = params["b1"].astype(jnp.float32)                   # [1, C1]
    b2 = params["b2"].astype(jnp.float32)                   # [1, C2]
    b3 = params["b3"].reshape(1, 1).astype(jnp.float32)     # [1, 1]

    grid_spec = pltpu.PrefetchScalarGridSpec(
        num_scalar_prefetch=1,                               # counts -> SMEM
        grid=(nb,),
        in_specs=[
            pl.BlockSpec((1, r, c0), lambda i, cnt: (i, 0, 0)),   # x tile/block
            pl.BlockSpec((c0, c1), lambda i, cnt: (0, 0)),        # weights resident
            pl.BlockSpec((1, c1), lambda i, cnt: (0, 0)),
            pl.BlockSpec((c1, c2), lambda i, cnt: (0, 0)),
            pl.BlockSpec((1, c2), lambda i, cnt: (0, 0)),
            pl.BlockSpec((1, c2), lambda i, cnt: (0, 0)),
            pl.BlockSpec((1, 1), lambda i, cnt: (0, 0)),
        ],
        out_specs=pl.BlockSpec((1, 1, r), lambda i, cnt: (i, 0, 0)),
    )
    return pl.pallas_call(
        _make_kernel(gb, ep),
        out_shape=jax.ShapeDtypeStruct((nb, 1, r), jnp.float32),
        grid_spec=grid_spec,
        compiler_params=pltpu.CompilerParams(
            dimension_semantics=("parallel",),
            vmem_limit_bytes=48 * 1024 * 1024),
    )(counts, x_blk, w1, b1, w2, b2, w3t, b3)


def extractor_mlp_forward(params, emb, edge_index, batch, *, num_graphs,
                          max_edges_per_graph=None, graphs_per_block=None,
                          learn_edge_att=True):
    """Pallas-backed ExtractorMLP.forward.

    max_edges_per_graph must be a static upper bound on the number of rows
    (edges if learn_edge_att else nodes) in any single graph; defaults to the
    total row count (always safe, at the cost of padding).
    """
    emb = emb.astype(jnp.float32)
    if learn_edge_att:
        col = edge_index[0].astype(jnp.int32)
        row = edge_index[1].astype(jnp.int32)
        b = batch[col].astype(jnp.int32)
        n_rows = col.shape[0]
    else:
        b = batch.astype(jnp.int32)
        n_rows = emb.shape[0]

    if max_edges_per_graph is None:
        max_edges_per_graph = n_rows
    # TODO(synk): rows of a graph exceeding max_edges_per_graph are silently
    # clipped (a static bound is required for the padded per-graph layout);
    # callers must pass a true upper bound.
    ep = max(8, -(-int(max_edges_per_graph) // 8) * 8)   # round up to sublane x8

    # Pack GB graphs per grid step: amortizes per-step overhead and widens the
    # lane-dense output row to GB*EP.
    if graphs_per_block is None:
        gb = max(1, min(8, 512 // ep))
    else:
        gb = int(graphs_per_block)
    gb = max(1, min(gb, int(num_graphs)))
    g_pad = -(-int(num_graphs) // gb) * gb
    nb = g_pad // gb

    # Group rows by graph and pad each graph to a fixed EP-row slot.
    order = jnp.argsort(b)
    b_sorted = b[order]
    counts = jnp.zeros((num_graphs,), jnp.int32).at[b].add(1)
    offsets = jnp.concatenate(
        [jnp.zeros((1,), jnp.int32), jnp.cumsum(counts)[:-1]])
    pos_in_graph = jnp.arange(n_rows, dtype=jnp.int32) - offsets[b_sorted]

    p_ids = jnp.arange(ep, dtype=jnp.int32)
    slot_pos = jnp.clip(offsets[:, None] + p_ids[None, :], 0, n_rows - 1)  # [G,EP]
    gather_idx = order[slot_pos]                                           # [G,EP]

    # Gather node features directly into the padded per-graph layout so the
    # un-padded [E, 2H] tensor is never materialized in HBM.
    # TODO(synk): the gather still runs as an XLA op in the wrapper; an
    # in-kernel DMA gather of emb rows would save one more HBM round-trip.
    if learn_edge_att:
        x_pad = jnp.concatenate(
            [emb[col[gather_idx]], emb[row[gather_idx]]], axis=-1)
    else:
        x_pad = emb[gather_idx]
    x_pad = x_pad.astype(jnp.bfloat16)                        # [G, EP, C0]
    c0 = x_pad.shape[-1]

    if g_pad > num_graphs:
        pad_g = g_pad - num_graphs
        x_pad = jnp.concatenate(
            [x_pad, jnp.zeros((pad_g, ep, c0), x_pad.dtype)], axis=0)
        counts_pad = jnp.concatenate([counts, jnp.zeros((pad_g,), jnp.int32)])
    else:
        counts_pad = counts
    counts_kernel = jnp.minimum(counts_pad, ep)               # clamp to slot size
    x_blk = x_pad.reshape(nb, gb * ep, c0)                    # [NB, GB*EP, C0]

    out_blk = _run_mlp_kernel(x_blk, counts_kernel, params, gb=gb, ep=ep)
    out2d = out_blk.reshape(g_pad, ep)[:num_graphs]           # [G, EP]

    # Scatter back to the original row order.
    vals_sorted = out2d[b_sorted, pos_in_graph]               # [n_rows]
    att = jnp.zeros((n_rows,), jnp.float32).at[order].set(vals_sorted)
    return att[:, None]                                       # [n_rows, 1]


def init_params(key, hidden_size, learn_edge_att=True):
    """Deterministic synthetic parameters for MLP([c0, c1, c2, 1])."""
    if learn_edge_att:
        channels = [hidden_size * 2, hidden_size * 4, hidden_size, 1]
    else:
        channels = [hidden_size * 1, hidden_size * 2, hidden_size, 1]
    ks = jax.random.split(key, 6)
    params = {}
    for i, name in enumerate(["1", "2", "3"]):
        cin, cout = channels[i], channels[i + 1]
        w = jax.random.normal(ks[2 * i], (cin, cout), jnp.float32) / np.sqrt(cin)
        bvec = jax.random.normal(ks[2 * i + 1], (1, cout), jnp.float32) * 0.01
        params[f"w{name}"] = w
        params[f"b{name}"] = bvec
    return params


def _reference_forward(params, emb, edge_index, batch, *, num_graphs,
                       learn_edge_att=True):
    """Pure-JAX reference mirroring the kernel numerics (bf16 matmul operands
    with f32 accumulation; normalization math in f32)."""
    if learn_edge_att:
        col, row = edge_index[0], edge_index[1]
        x = jnp.concatenate([emb[col], emb[row]], axis=-1)
        b = batch[col]
    else:
        x, b = emb, batch
    b = b.astype(jnp.int32)
    cnt = jnp.maximum(
        jax.ops.segment_sum(jnp.ones(x.shape[0], jnp.float32), b, num_graphs),
        1.0)[:, None]                                              # [G, 1]

    def inorm_relu(h):
        mean = jax.ops.segment_sum(h, b, num_graphs) / cnt
        var = jax.ops.segment_sum(h * h, b, num_graphs) / cnt - mean * mean
        var = jnp.maximum(var, 0.0)
        hn = (h - mean[b]) * jax.lax.rsqrt(var[b] + _EPS)
        return jnp.maximum(hn, 0.0)

    def mm(a, w):
        return jnp.dot(a.astype(jnp.bfloat16), w.astype(jnp.bfloat16),
                       preferred_element_type=jnp.float32)

    h1 = inorm_relu(mm(x, params["w1"]) + params["b1"])
    h2 = inorm_relu(mm(h1, params["w2"]) + params["b2"])
    return mm(h2, params["w3"]) + params["b3"]


if __name__ == "__main__":
    hidden_size = 32
    num_nodes = 16
    num_edges = 32
    num_graphs = 2
    learn_edge_att = True

    key = jax.random.PRNGKey(0)
    k_emb, k_src, k_dst, k_par = jax.random.split(key, 4)

    emb = jax.random.normal(k_emb, (num_nodes, hidden_size), jnp.float32)
    # nodes 0..7 -> graph 0, nodes 8..15 -> graph 1
    batch = jnp.concatenate([jnp.zeros(8, jnp.int32), jnp.ones(8, jnp.int32)])
    # edges stay within their graph (16 per graph)
    src0 = jax.random.randint(k_src, (num_edges // 2,), 0, 8)
    dst0 = jax.random.randint(k_dst, (num_edges // 2,), 0, 8)
    src1 = jax.random.randint(k_src, (num_edges // 2,), 8, 16)
    dst1 = jax.random.randint(k_dst, (num_edges // 2,), 8, 16)
    edge_index = jnp.stack([
        jnp.concatenate([src0, src1]),
        jnp.concatenate([dst0, dst1]),
    ]).astype(jnp.int32)                                        # [2, E]

    params = init_params(k_par, hidden_size, learn_edge_att)

    fwd = jax.jit(functools.partial(
        extractor_mlp_forward, num_graphs=num_graphs,
        max_edges_per_graph=num_edges // num_graphs,
        learn_edge_att=learn_edge_att))
    out = fwd(params, emb, edge_index, batch)
    out = jax.block_until_ready(out)

    ref = _reference_forward(params, emb, edge_index, batch,
                             num_graphs=num_graphs, learn_edge_att=learn_edge_att)
    np.testing.assert_allclose(np.asarray(out), np.asarray(ref),
                               rtol=1e-2, atol=1e-2)

    assert out.shape == (num_edges, 1)
    print("KERNEL_OK")
</pallas_src>

<mosaic_0001>
module attributes {stable_mosaic.version = 11 : i64} {
  func.func @kernel(%arg0: i32, %arg1: memref<2xi32, #tpu.memory_space<smem>>, %arg2: memref<1x32x64xbf16, #tpu.memory_space<vmem>>, %arg3: memref<64x128xbf16, #tpu.memory_space<vmem>>, %arg4: memref<1x128xf32, #tpu.memory_space<vmem>>, %arg5: memref<128x32xbf16, #tpu.memory_space<vmem>>, %arg6: memref<1x32xf32, #tpu.memory_space<vmem>>, %arg7: memref<1x32xbf16, #tpu.memory_space<vmem>>, %arg8: memref<1x1xf32, #tpu.memory_space<vmem>>, %arg9: memref<1x1x32xf32, #tpu.memory_space<vmem>>) attributes {dimension_semantics = [#tpu.dimension_semantics<parallel>], iteration_bounds = array<i64: 1>, scalar_prefetch = 1 : i64, scratch_operands = 0 : i64, tpu.core_type = #tpu.core_type<tc>, window_params = [{transform_indices = @transform_0, window_bounds = array<i64: 1, 32, 64>}, {pipeline_mode = #tpu.pipeline_mode<synchronous>, transform_indices = @transform_1, window_bounds = array<i64: 64, 128>}, {pipeline_mode = #tpu.pipeline_mode<synchronous>, transform_indices = @transform_2, window_bounds = array<i64: 1, 128>}, {pipeline_mode = #tpu.pipeline_mode<synchronous>, transform_indices = @transform_3, window_bounds = array<i64: 128, 32>}, {pipeline_mode = #tpu.pipeline_mode<synchronous>, transform_indices = @transform_4, window_bounds = array<i64: 1, 32>}, {pipeline_mode = #tpu.pipeline_mode<synchronous>, transform_indices = @transform_5, window_bounds = array<i64: 1, 32>}, {pipeline_mode = #tpu.pipeline_mode<synchronous>, transform_indices = @transform_6, window_bounds = array<i64: 1, 1>}, {transform_indices = @transform_7, window_bounds = array<i64: 1, 1, 32>}]} {
    %c2_i32 = arith.constant 2 : i32
    %0 = arith.muli %arg0, %c2_i32 : i32
    %c0 = arith.constant 0 : index
    %c0_0 = arith.constant 0 : index
    %c0_1 = arith.constant 0 : index
    %1 = vector.load %arg2[%c0, %c0_0, %c0_1] : memref<1x32x64xbf16, #tpu.memory_space<vmem>>, vector<1x32x64xbf16>
    %2 = vector.shape_cast %1 : vector<1x32x64xbf16> to vector<32x64xbf16>
    %3 = tpu.iota {dimensions = array<i32: 0>} : vector<16x1xi32>
    %c0_i32 = arith.constant 0 : i32
    %4 = arith.addi %0, %c0_i32 : i32
    %5 = arith.index_cast %4 : i32 to index
    %6 = memref.load %arg1[%5] : memref<2xi32, #tpu.memory_space<smem>>
    %7 = vector.broadcast %6 : i32 to vector<16x1xi32>
    %8 = arith.cmpi slt, %3, %7 : vector<16x1xi32>
    %9 = arith.extui %8 : vector<16x1xi1> to vector<16x1xi32>
    %10 = arith.sitofp %9 : vector<16x1xi32> to vector<16x1xf32>
    %11 = arith.sitofp %6 : i32 to f32
    %cst = arith.constant 1.000000e+00 : f32
    %12 = arith.maximumf %11, %cst : f32
    %cst_2 = arith.constant 1.000000e+00 : f32
    %13 = arith.divf %cst_2, %12 : f32
    %c1_i32 = arith.constant 1 : i32
    %14 = arith.addi %0, %c1_i32 : i32
    %15 = arith.index_cast %14 : i32 to index
    %16 = memref.load %arg1[%15] : memref<2xi32, #tpu.memory_space<smem>>
    %17 = vector.broadcast %16 : i32 to vector<16x1xi32>
    %18 = arith.cmpi slt, %3, %17 : vector<16x1xi32>
    %19 = arith.extui %18 : vector<16x1xi1> to vector<16x1xi32>
    %20 = arith.sitofp %19 : vector<16x1xi32> to vector<16x1xf32>
    %21 = arith.sitofp %16 : i32 to f32
    %cst_3 = arith.constant 1.000000e+00 : f32
    %22 = arith.maximumf %21, %cst_3 : f32
    %cst_4 = arith.constant 1.000000e+00 : f32
    %23 = arith.divf %cst_4, %22 : f32
    %c0_5 = arith.constant 0 : index
    %c0_6 = arith.constant 0 : index
    %24 = vector.load %arg3[%c0_5, %c0_6] : memref<64x128xbf16, #tpu.memory_space<vmem>>, vector<64x128xbf16>
    %cst_7 = arith.constant dense<0.000000e+00> : vector<32x128xf32>
    %25 = tpu.matmul %2, %24, %cst_7 {dimension_numbers = #tpu.dot_dimension_numbers<[1], [0], [0], [1], [0, 0, 1, 1], [], []>} : vector<32x64xbf16>, vector<64x128xbf16>, vector<32x128xf32> -> vector<32x128xf32>
    %c0_8 = arith.constant 0 : index
    %c0_9 = arith.constant 0 : index
    %26 = vector.load %arg4[%c0_8, %c0_9] : memref<1x128xf32, #tpu.memory_space<vmem>>, vector<1x128xf32>
    %27 = vector.broadcast %26 : vector<1x128xf32> to vector<32x128xf32>
    %28 = arith.addf %25, %27 : vector<32x128xf32>
    %29 = vector.extract_strided_slice %28 {offsets = [0, 0], sizes = [16, 128], strides = [1, 1]} : vector<32x128xf32> to vector<16x128xf32>
    %30 = vector.broadcast %10 : vector<16x1xf32> to vector<16x128xf32>
    %31 = arith.mulf %29, %30 : vector<16x128xf32>
    %cst_10 = arith.constant dense<0.000000e+00> : vector<128xf32>
    %32 = vector.multi_reduction <add>, %31, %cst_10 [0] : vector<16x128xf32> to vector<128xf32>
    %33 = vector.shape_cast %32 : vector<128xf32> to vector<1x128xf32>
    %34 = vector.broadcast %13 : f32 to vector<1x128xf32>
    %35 = arith.mulf %33, %34 : vector<1x128xf32>
    %36 = arith.mulf %31, %29 : vector<16x128xf32>
    %cst_11 = arith.constant dense<0.000000e+00> : vector<128xf32>
    %37 = vector.multi_reduction <add>, %36, %cst_11 [0] : vector<16x128xf32> to vector<128xf32>
    %38 = vector.shape_cast %37 : vector<128xf32> to vector<1x128xf32>
    %39 = vector.broadcast %13 : f32 to vector<1x128xf32>
    %40 = arith.mulf %38, %39 : vector<1x128xf32>
    %41 = arith.mulf %35, %35 : vector<1x128xf32>
    %42 = arith.subf %40, %41 : vector<1x128xf32>
    %cst_12 = arith.constant 0.000000e+00 : f32
    %43 = vector.broadcast %cst_12 : f32 to vector<1x128xf32>
    %44 = arith.maximumf %42, %43 : vector<1x128xf32>
    %45 = vector.broadcast %35 : vector<1x128xf32> to vector<16x128xf32>
    %46 = arith.subf %29, %45 : vector<16x128xf32>
    %cst_13 = arith.constant 9.99999974E-6 : f32
    %47 = vector.broadcast %cst_13 : f32 to vector<1x128xf32>
    %48 = arith.addf %44, %47 : vector<1x128xf32>
    %49 = math.rsqrt %48 : vector<1x128xf32>
    %50 = vector.broadcast %49 : vector<1x128xf32> to vector<16x128xf32>
    %51 = arith.mulf %46, %50 : vector<16x128xf32>
    %cst_14 = arith.constant 0.000000e+00 : f32
    %52 = vector.broadcast %cst_14 : f32 to vector<16x128xf32>
    %53 = arith.maximumf %51, %52 : vector<16x128xf32>
    %54 = vector.extract_strided_slice %28 {offsets = [16, 0], sizes = [16, 128], strides = [1, 1]} : vector<32x128xf32> to vector<16x128xf32>
    %55 = vector.broadcast %20 : vector<16x1xf32> to vector<16x128xf32>
    %56 = arith.mulf %54, %55 : vector<16x128xf32>
    %cst_15 = arith.constant dense<0.000000e+00> : vector<128xf32>
    %57 = vector.multi_reduction <add>, %56, %cst_15 [0] : vector<16x128xf32> to vector<128xf32>
    %58 = vector.shape_cast %57 : vector<128xf32> to vector<1x128xf32>
    %59 = vector.broadcast %23 : f32 to vector<1x128xf32>
    %60 = arith.mulf %58, %59 : vector<1x128xf32>
    %61 = arith.mulf %56, %54 : vector<16x128xf32>
    %cst_16 = arith.constant dense<0.000000e+00> : vector<128xf32>
    %62 = vector.multi_reduction <add>, %61, %cst_16 [0] : vector<16x128xf32> to vector<128xf32>
    %63 = vector.shape_cast %62 : vector<128xf32> to vector<1x128xf32>
    %64 = vector.broadcast %23 : f32 to vector<1x128xf32>
    %65 = arith.mulf %63, %64 : vector<1x128xf32>
    %66 = arith.mulf %60, %60 : vector<1x128xf32>
    %67 = arith.subf %65, %66 : vector<1x128xf32>
    %cst_17 = arith.constant 0.000000e+00 : f32
    %68 = vector.broadcast %cst_17 : f32 to vector<1x128xf32>
    %69 = arith.maximumf %67, %68 : vector<1x128xf32>
    %70 = vector.broadcast %60 : vector<1x128xf32> to vector<16x128xf32>
    %71 = arith.subf %54, %70 : vector<16x128xf32>
    %cst_18 = arith.constant 9.99999974E-6 : f32
    %72 = vector.broadcast %cst_18 : f32 to vector<1x128xf32>
    %73 = arith.addf %69, %72 : vector<1x128xf32>
    %74 = math.rsqrt %73 : vector<1x128xf32>
    %75 = vector.broadcast %74 : vector<1x128xf32> to vector<16x128xf32>
    %76 = arith.mulf %71, %75 : vector<16x128xf32>
    %cst_19 = arith.constant 0.000000e+00 : f32
    %77 = vector.broadcast %cst_19 : f32 to vector<16x128xf32>
    %78 = arith.maximumf %76, %77 : vector<16x128xf32>
    %79 = tpu.concatenate %53, %78 in 0 : vector<16x128xf32>, vector<16x128xf32> -> vector<32x128xf32>
    %80 = arith.truncf %79 : vector<32x128xf32> to vector<32x128xbf16>
    %c0_20 = arith.constant 0 : index
    %c0_21 = arith.constant 0 : index
    %81 = vector.load %arg5[%c0_20, %c0_21] : memref<128x32xbf16, #tpu.memory_space<vmem>>, vector<128x32xbf16>
    %cst_22 = arith.constant dense<0.000000e+00> : vector<32x32xf32>
    %82 = tpu.matmul %80, %81, %cst_22 {dimension_numbers = #tpu.dot_dimension_numbers<[1], [0], [0], [1], [0, 0, 1, 1], [], []>} : vector<32x128xbf16>, vector<128x32xbf16>, vector<32x32xf32> -> vector<32x32xf32>
    %c0_23 = arith.constant 0 : index
    %c0_24 = arith.constant 0 : index
    %83 = vector.load %arg6[%c0_23, %c0_24] : memref<1x32xf32, #tpu.memory_space<vmem>>, vector<1x32xf32>
    %84 = vector.broadcast %83 : vector<1x32xf32> to vector<32x32xf32>
    %85 = arith.addf %82, %84 : vector<32x32xf32>
    %86 = vector.extract_strided_slice %85 {offsets = [0, 0], sizes = [16, 32], strides = [1, 1]} : vector<32x32xf32> to vector<16x32xf32>
    %87 = vector.broadcast %10 : vector<16x1xf32> to vector<16x32xf32>
    %88 = arith.mulf %86, %87 : vector<16x32xf32>
    %cst_25 = arith.constant dense<0.000000e+00> : vector<32xf32>
    %89 = vector.multi_reduction <add>, %88, %cst_25 [0] : vector<16x32xf32> to vector<32xf32>
    %90 = vector.shape_cast %89 : vector<32xf32> to vector<1x32xf32>
    %91 = vector.broadcast %13 : f32 to vector<1x32xf32>
    %92 = arith.mulf %90, %91 : vector<1x32xf32>
    %93 = arith.mulf %88, %86 : vector<16x32xf32>
    %cst_26 = arith.constant dense<0.000000e+00> : vector<32xf32>
    %94 = vector.multi_reduction <add>, %93, %cst_26 [0] : vector<16x32xf32> to vector<32xf32>
    %95 = vector.shape_cast %94 : vector<32xf32> to vector<1x32xf32>
    %96 = vector.broadcast %13 : f32 to vector<1x32xf32>
    %97 = arith.mulf %95, %96 : vector<1x32xf32>
    %98 = arith.mulf %92, %92 : vector<1x32xf32>
    %99 = arith.subf %97, %98 : vector<1x32xf32>
    %cst_27 = arith.constant 0.000000e+00 : f32
    %100 = vector.broadcast %cst_27 : f32 to vector<1x32xf32>
    %101 = arith.maximumf %99, %100 : vector<1x32xf32>
    %102 = vector.broadcast %92 : vector<1x32xf32> to vector<16x32xf32>
    %103 = arith.subf %86, %102 : vector<16x32xf32>
    %cst_28 = arith.constant 9.99999974E-6 : f32
    %104 = vector.broadcast %cst_28 : f32 to vector<1x32xf32>
    %105 = arith.addf %101, %104 : vector<1x32xf32>
    %106 = math.rsqrt %105 : vector<1x32xf32>
    %107 = vector.broadcast %106 : vector<1x32xf32> to vector<16x32xf32>
    %108 = arith.mulf %103, %107 : vector<16x32xf32>
    %cst_29 = arith.constant 0.000000e+00 : f32
    %109 = vector.broadcast %cst_29 : f32 to vector<16x32xf32>
    %110 = arith.maximumf %108, %109 : vector<16x32xf32>
    %111 = vector.extract_strided_slice %85 {offsets = [16, 0], sizes = [16, 32], strides = [1, 1]} : vector<32x32xf32> to vector<16x32xf32>
    %112 = vector.broadcast %20 : vector<16x1xf32> to vector<16x32xf32>
    %113 = arith.mulf %111, %112 : vector<16x32xf32>
    %cst_30 = arith.constant dense<0.000000e+00> : vector<32xf32>
    %114 = vector.multi_reduction <add>, %113, %cst_30 [0] : vector<16x32xf32> to vector<32xf32>
    %115 = vector.shape_cast %114 : vector<32xf32> to vector<1x32xf32>
    %116 = vector.broadcast %23 : f32 to vector<1x32xf32>
    %117 = arith.mulf %115, %116 : vector<1x32xf32>
    %118 = arith.mulf %113, %111 : vector<16x32xf32>
    %cst_31 = arith.constant dense<0.000000e+00> : vector<32xf32>
    %119 = vector.multi_reduction <add>, %118, %cst_31 [0] : vector<16x32xf32> to vector<32xf32>
    %120 = vector.shape_cast %119 : vector<32xf32> to vector<1x32xf32>
    %121 = vector.broadcast %23 : f32 to vector<1x32xf32>
    %122 = arith.mulf %120, %121 : vector<1x32xf32>
    %123 = arith.mulf %117, %117 : vector<1x32xf32>
    %124 = arith.subf %122, %123 : vector<1x32xf32>
    %cst_32 = arith.constant 0.000000e+00 : f32
    %125 = vector.broadcast %cst_32 : f32 to vector<1x32xf32>
    %126 = arith.maximumf %124, %125 : vector<1x32xf32>
    %127 = vector.broadcast %117 : vector<1x32xf32> to vector<16x32xf32>
    %128 = arith.subf %111, %127 : vector<16x32xf32>
    %cst_33 = arith.constant 9.99999974E-6 : f32
    %129 = vector.broadcast %cst_33 : f32 to vector<1x32xf32>
    %130 = arith.addf %126, %129 : vector<1x32xf32>
    %131 = math.rsqrt %130 : vector<1x32xf32>
    %132 = vector.broadcast %131 : vector<1x32xf32> to vector<16x32xf32>
    %133 = arith.mulf %128, %132 : vector<16x32xf32>
    %cst_34 = arith.constant 0.000000e+00 : f32
    %134 = vector.broadcast %cst_34 : f32 to vector<16x32xf32>
    %135 = arith.maximumf %133, %134 : vector<16x32xf32>
    %136 = tpu.concatenate %110, %135 in 0 : vector<16x32xf32>, vector<16x32xf32> -> vector<32x32xf32>
    %c0_35 = arith.constant 0 : index
    %c0_36 = arith.constant 0 : index
    %137 = vector.load %arg7[%c0_35, %c0_36] : memref<1x32xbf16, #tpu.memory_space<vmem>>, vector<1x32xbf16>
    %138 = arith.truncf %136 : vector<32x32xf32> to vector<32x32xbf16>
    %cst_37 = arith.constant dense<0.000000e+00> : vector<1x32xf32>
    %139 = tpu.matmul %137, %138, %cst_37 {dimension_numbers = #tpu.dot_dimension_numbers<[1], [1], [0], [0], [0, 0, 1, 0], [], []>} : vector<1x32xbf16>, vector<32x32xbf16>, vector<1x32xf32> -> vector<1x32xf32>
    %c0_38 = arith.constant 0 : index
    %c0_39 = arith.constant 0 : index
    %140 = vector.load %arg8[%c0_38, %c0_39] : memref<1x1xf32, #tpu.memory_space<vmem>>, vector<1x1xf32>
    %141 = vector.broadcast %140 : vector<1x1xf32> to vector<1x32xf32>
    %142 = arith.addf %139, %141 : vector<1x32xf32>
    %c0_40 = arith.constant 0 : index
    %c0_41 = arith.constant 0 : index
    %c0_42 = arith.constant 0 : index
    %143 = vector.load %arg9[%c0_40, %c0_41, %c0_42] : memref<1x1x32xf32, #tpu.memory_space<vmem>>, vector<1x1x32xf32>
    %144 = vector.shape_cast %143 : vector<1x1x32xf32> to vector<1x32xf32>
    %145 = vector.shape_cast %142 : vector<1x32xf32> to vector<1x1x32xf32>
    tpu.vector_store %arg9[%c0_40, %c0_41, %c0_42], %145 {strides = array<i32>} : memref<1x1x32xf32, #tpu.memory_space<vmem>>, vector<1x1x32xf32>,
    return
  }
  func.func @transform_0(%arg0: i32, %arg1: memref<2xi32, #tpu.memory_space<smem>>) -> (i32, i32, i32) {
    %c0_i32 = arith.constant 0 : i32
    %c0_i32_0 = arith.constant 0 : i32
    %c0_i32_1 = arith.constant 0 : i32
    return %arg0, %c0_i32, %c0_i32_0 : i32, i32, i32
  }
  func.func @transform_1(%arg0: i32, %arg1: memref<2xi32, #tpu.memory_space<smem>>) -> (i32, i32) {
    %c0_i32 = arith.constant 0 : i32
    %c0_i32_0 = arith.constant 0 : i32
    %c0_i32_1 = arith.constant 0 : i32
    return %c0_i32, %c0_i32_0 : i32, i32
  }
  func.func @transform_2(%arg0: i32, %arg1: memref<2xi32, #tpu.memory_space<smem>>) -> (i32, i32) {
    %c0_i32 = arith.constant 0 : i32
    %c0_i32_0 = arith.constant 0 : i32
    %c0_i32_1 = arith.constant 0 : i32
    return %c0_i32, %c0_i32_0 : i32, i32
  }
  func.func @transform_3(%arg0: i32, %arg1: memref<2xi32, #tpu.memory_space<smem>>) -> (i32, i32) {
    %c0_i32 = arith.constant 0 : i32
    %c0_i32_0 = arith.constant 0 : i32
    %c0_i32_1 = arith.constant 0 : i32
    return %c0_i32, %c0_i32_0 : i32, i32
  }
  func.func @transform_4(%arg0: i32, %arg1: memref<2xi32, #tpu.memory_space<smem>>) -> (i32, i32) {
    %c0_i32 = arith.constant 0 : i32
    %c0_i32_0 = arith.constant 0 : i32
    %c0_i32_1 = arith.constant 0 : i32
    return %c0_i32, %c0_i32_0 : i32, i32
  }
  func.func @transform_5(%arg0: i32, %arg1: memref<2xi32, #tpu.memory_space<smem>>) -> (i32, i32) {
    %c0_i32 = arith.constant 0 : i32
    %c0_i32_0 = arith.constant 0 : i32
    %c0_i32_1 = arith.constant 0 : i32
    return %c0_i32, %c0_i32_0 : i32, i32
  }
  func.func @transform_6(%arg0: i32, %arg1: memref<2xi32, #tpu.memory_space<smem>>) -> (i32, i32) {
    %c0_i32 = arith.constant 0 : i32
    %c0_i32_0 = arith.constant 0 : i32
    %c0_i32_1 = arith.constant 0 : i32
    return %c0_i32, %c0_i32_0 : i32, i32
  }
  func.func @transform_7(%arg0: i32, %arg1: memref<2xi32, #tpu.memory_space<smem>>) -> (i32, i32, i32) {
    %c0_i32 = arith.constant 0 : i32
    %c0_i32_0 = arith.constant 0 : i32
    %c0_i32_1 = arith.constant 0 : i32
    return %arg0, %c0_i32, %c0_i32_0 : i32, i32, i32
  }
}

</mosaic_0001>

<llo_original>
// kernel: extractor_mlp_forward.1
$region0: #{extractor_mlp_forward.1}
  #allocation0 [shape = 'u32[]', space=smem, size = 0x4, offset = 0x4, fixed_abs, tag = 'smem constant byte address 0x4 - core index']
  #allocation1 [shape = 'u32[72,128]{1,0:T(1,128)}', space=vmem, size = 0x9000, scoped, tag = 'internal scratch']
  #allocation2 [shape = 's32[1]{0}', space=sflag, size = 0x4, scoped, tag = 'scoped memory for extractor_mlp_forward.1']
  #allocation3 [shape = 'u8[512]{0}', space=smem, size = 0x200, scoped, tag = 'prefetched SMEM operand 0']
  #allocation4 [shape = 'f32[1,1]{1,0:T(1,128)S(1)}', space=vmem, size = 0x200, scoped, tag = 'scoped memory for extractor_mlp_forward.1']
  %s0 = inlined_call_operand.vmem [shape: s32[2], index: 0, kind: input, shape index: {}]
  %s1 = inlined_call_operand.vmem [shape: bf16[1,32,64], index: 1, kind: input, shape index: {}]
  %s2 = inlined_call_operand.vmem [shape: bf16[64,128], index: 2, kind: input, shape index: {}]
  %s3 = inlined_call_operand.vmem [shape: f32[1,128], index: 3, kind: input, shape index: {}]
  %s4 = inlined_call_operand.vmem [shape: bf16[128,32], index: 4, kind: input, shape index: {}]
  %s5 = inlined_call_operand.vmem [shape: f32[1,32], index: 5, kind: input, shape index: {}]
  %s6 = inlined_call_operand.vmem [shape: bf16[1,32], index: 6, kind: input, shape index: {}]
  %s7 = inlined_call_operand.<no memory space> [shape: f32[1,1], index: 7, kind: input, shape index: {}]
  %s8 = inlined_call_operand.vmem [shape: f32[1,1,32], index: 8, kind: output, shape index: {}]
  %s9 = sld [smem:[#allocation0]]
  $region38: #{extractor_mlp_forward.1} parent=0
    _
  %s11 = ssub.s32 1, %s9
  %s12 = scalar_select 0, %s11, %s9
  %s14 = sshll.u32 %s0, 4
  %s15 = int_to_ptr.vmem [resolvable:$true] %s14
  %17 = dma.vmem_to_smem %s15, 16, [#allocation3], [#allocation2]
  %v18 = vstv %s7
  %19 = vst [vmem:[#allocation4] sm:$0x1] %v18
  %21 = dma.done [#allocation2], 16
  %22 = sfence
  // Predicated region
  $region2: #{extractor_mlp_forward.1} parent=0 // pred_check
    _
  $region3: #{extractor_mlp_forward.1} parent=0 // pred_check_branch
    %24 = sbr.rel (0) target = $region5
  $region4: #{extractor_mlp_forward.1} parent=0 // pred_region
    _
  $region5: #{extractor_mlp_forward.1} parent=0 // pred_fallthru
    _
  // Predicated region
  $region6: #{extractor_mlp_forward.1} parent=0 // pred_check
    _
  $region7: #{extractor_mlp_forward.1} parent=0 // pred_check_branch
    %26 = sbr.rel (0) target = $region9
  $region8: #{extractor_mlp_forward.1} parent=0 // pred_region
    _
  $region9: #{extractor_mlp_forward.1} parent=0 // pred_fallthru
    _
  // Predicated region
  $region10: #{extractor_mlp_forward.1} parent=0 // pred_check
    _
  $region11: #{extractor_mlp_forward.1} parent=0 // pred_check_branch
    %28 = sbr.rel (0) target = $region13
  $region12: #{extractor_mlp_forward.1} parent=0 // pred_region
    _
  $region13: #{extractor_mlp_forward.1} parent=0 // pred_fallthru
    _
  // Predicated region
  $region14: #{extractor_mlp_forward.1} parent=0 // pred_check
    _
  $region15: #{extractor_mlp_forward.1} parent=0 // pred_check_branch
    %30 = sbr.rel (0) target = $region17
  $region16: #{extractor_mlp_forward.1} parent=0 // pred_region
    _
  $region17: #{extractor_mlp_forward.1} parent=0 // pred_fallthru
    _
  // Predicated region
  $region18: #{extractor_mlp_forward.1} parent=0 // pred_check
    _
  $region19: #{extractor_mlp_forward.1} parent=0 // pred_check_branch
    %32 = sbr.rel (0) target = $region21
  $region20: #{extractor_mlp_forward.1} parent=0 // pred_region
    _
  $region21: #{extractor_mlp_forward.1} parent=0 // pred_fallthru
    _
  // Predicated region
  $region22: #{extractor_mlp_forward.1} parent=0 // pred_check
    _
  $region23: #{extractor_mlp_forward.1} parent=0 // pred_check_branch
    %34 = sbr.rel (0) target = $region25
  $region24: #{extractor_mlp_forward.1} parent=0 // pred_region
    _
  $region25: #{extractor_mlp_forward.1} parent=0 // pred_fallthru
    _
  // Predicated region
  $region26: #{extractor_mlp_forward.1} parent=0 // pred_check
    _
  $region27: #{extractor_mlp_forward.1} parent=0 // pred_check_branch
    %36 = sbr.rel (0) target = $region29
  $region28: #{extractor_mlp_forward.1} parent=0 // pred_region
    _
  $region29: #{extractor_mlp_forward.1} parent=0 // pred_fallthru
    _
  %s38 = smul.u32 0, 2
  %v39 = vld [vmem:[%s1] sm:$0xf]
  %v40 = vld [vmem:[%s1 + $0x4] sm:$0xf]
  %v41 = vld [vmem:[%s1 + $0x8] sm:$0xf]
  %v42 = vld [vmem:[%s1 + $0xc] sm:$0xf]
  %v43 = vlaneseq
  %v44 = vshrl.u32 %v43, 7
  %v45 = vadd.s32 %v44, 8
  %s46 = sld [smem:[#allocation3 + %s38]]
  %v47 = vstv %s46
  %vm48 = vcmp.lt.s32.totalorder %v44, %v47
  %vm49 = vcmp.lt.s32.totalorder %v45, %v47
  %v50 = vsel %vm48, 1, 0
  %v51 = vsel %vm49, 1, 0
  %v52 = vcvt.s32.f32 %v50
  %v53 = vcvt.s32.f32 %v51
  %s54 = scvt.s32.f32 %s46
  %s55 = smax.f32 %s54, 1.0
  %v56 = vstv %s55
  %v57 = vrcp.pop %v56
  %v58 = vmul.f32 %v56, %v57
  %v59 = vsub.f32 1.0, %v58
  %v60 = vmul.f32 %v57, %v59
  %v61 = vadd.f32 %v57, %v60
  %vm62 = vweird.f32 %v56
  %vm63 = vweird.f32 %v57
  %vm64 = vmor %vm62, %vm63
  %v65 = vsel %vm64, %v57, %v61
  %v66 = vand.u32 2147483647, %v56
  %vm67 = vcmp.eq.f32.partialorder %v66, 8.507059e+37
  %v68 = vand.u32 %v56, 2147483648
  %v69 = vor.u32 1.1754944e-38, %v68
  %v70 = vsel %vm67, %v69, %v65
  %s71 = vtos %v70
  %s72 = sadd.s32 %s38, 1
  %s73 = sld [smem:[#allocation3 + %s72]]
  %v74 = vstv %s73
  %vm75 = vcmp.lt.s32.totalorder %v44, %v74
  %vm76 = vcmp.lt.s32.totalorder %v45, %v74
  %v77 = vsel %vm75, 1, 0
  %v78 = vsel %vm76, 1, 0
  %v79 = vcvt.s32.f32 %v77
  %v80 = vcvt.s32.f32 %v78
  %s81 = scvt.s32.f32 %s73
  %s82 = smax.f32 %s81, 1.0
  %v83 = vstv %s82
  %v84 = vrcp.pop %v83
  %v85 = vmul.f32 %v83, %v84
  %v86 = vsub.f32 1.0, %v85
  %v87 = vmul.f32 %v84, %v86
  %v88 = vadd.f32 %v84, %v87
  %vm89 = vweird.f32 %v83
  %vm90 = vweird.f32 %v84
  %vm91 = vmor %vm89, %vm90
  %v92 = vsel %vm91, %v84, %v88
  %v93 = vand.u32 2147483647, %v83
  %vm94 = vcmp.eq.f32.partialorder %v93, 8.507059e+37
  %v95 = vand.u32 %v83, 2147483648
  %v96 = vor.u32 1.1754944e-38, %v95
  %v97 = vsel %vm94, %v96, %v92
  %s98 = vtos %v97
  %v99 = vld [vmem:[%s2] sm:$0xf]
  %v100 = vld [vmem:[%s2 + $0x4] sm:$0xf]
  %v101 = vld [vmem:[%s2 + $0x8] sm:$0xf]
  %v102 = vld [vmem:[%s2 + $0xc] sm:$0xf]
  %v103 = vld [vmem:[%s2 + $0x10] sm:$0xf]
  %v104 = vld [vmem:[%s2 + $0x14] sm:$0xf]
  %v105 = vld [vmem:[%s2 + $0x18] sm:$0xf]
  %v106 = vld [vmem:[%s2 + $0x1c] sm:$0xf]
  %v107 = vld [vmem:[%s3] sm:$0x1]
  %v109 = vperm.slane %v107, 0
  %v115 = vunpack.c.l.b16 %v39
  %v116 = vunpack.c.l.b16 %v40
  %v117 = vunpack.c.l.b16 %v41
  %v118 = vunpack.c.l.b16 %v42
  %v119 = vpack.c.b16 %v116, %v115
  %v120 = vpack.c.b16 %v118, %v117
  %v129 = vunpack.c.l.b16 %v99
  %v130 = vunpack.c.l.b16 %v100
  %v131 = vunpack.c.l.b16 %v101
  %v132 = vunpack.c.l.b16 %v102
  %v133 = vunpack.c.l.b16 %v103
  %v134 = vunpack.c.l.b16 %v104
  %v135 = vunpack.c.l.b16 %v105
  %v136 = vunpack.c.l.b16 %v106
  %v137 = vpack.c.b16 %v130, %v129
  %v138 = vpack.c.b16 %v132, %v131
  %v139 = vpack.c.b16 %v134, %v133
  %v140 = vpack.c.b16 %v136, %v135
  %vm145 = vcmask 523264
  %v147 = vsel %vm145, %v119, 0
  %v150 = vsel %vm145, %v120, 0
  %152 = vmatpush.bf16.msra.mxu0 0
  %153 = vmatpush.bf16.msra.mxu0 0
  %154 = vmatpush.bf16.msra.mxu0 0
  %155 = vmatpush.bf16.msra.mxu0 0
  %156 = vmatpush.bf16.msra.mxu0 %v140
  %157 = vmatpush.bf16.msra.mxu0 %v139
  %158 = vmatpush.bf16.msra.mxu0 %v138
  %159 = vmatpush.bf16.msra.mxu0 %v137
  %160 = vmatmul.bf16.gmra.mxu0 %v147
  %v161 = vpop.f32.mrf.mxu0
  %v162 = vadd.f32 %v109, %v161
  %v163 = vpop.f32.mrf.mxu0
  %v164 = vadd.f32 %v109, %v163
  %165 = vmatmul.bf16.gmra.mxu0 %v150
  %v166 = vpop.f32.mrf.mxu0
  %v167 = vadd.f32 %v109, %v166
  %v168 = vpop.f32.mrf.mxu0
  %v169 = vadd.f32 %v109, %v168
  %170 = vdwg.mxu0
  %v171 = vmul.f32 %v162, %v52
  %v172 = vmul.f32 %v164, %v53
  %v173 = vadd.f32 %v171, %v172
  %v174 = vrot.slane %v173, 4
  %v175 = vadd.f32 %v173, %v174
  %v176 = vrot.slane %v175, 2
  %v177 = vadd.f32 %v175, %v176
  %v178 = vrot.slane %v177, 1
  %v179 = vadd.f32 %v177, %v178
  %v180 = vstv %s71
  %v181 = vmul.f32 %v179, %v180
  %v182 = vmul.f32 %v171, %v162
  %v183 = vmul.f32 %v172, %v164
  %v184 = vadd.f32 %v182, %v183
  %v185 = vrot.slane %v184, 4
  %v186 = vadd.f32 %v184, %v185
  %v187 = vrot.slane %v186, 2
  %v188 = vadd.f32 %v186, %v187
  %v189 = vrot.slane %v188, 1
  %v190 = vadd.f32 %v188, %v189
  %v191 = vmul.f32 %v190, %v180
  %v192 = vmul.f32 %v181, %v181
  %v193 = vsub.f32 %v191, %v192
  %v194 = vmax.f32 %v193, 0.0
  %v195 = vsub.f32 %v162, %v181
  %v196 = vsub.f32 %v164, %v181
  %v197 = vadd.f32 %v194, 1e-05
  %v198 = vrsqrt.pop %v197
  %v199 = vmul.f32 %v198, %v197
  %v200 = vmul.f32 %v199, %v198
  %v201 = vmul.f32 0.5, %v200
  %v202 = vsub.f32 1.5, %v201
  %v203 = vmul.f32 %v198, %v202
  %vm204 = vweird.f32 %v197
  %vm205 = vweird.f32 %v198
  %vm206 = vmor %vm204, %vm205
  %v207 = vsel %vm206, %v198, %v203
  %v208 = vmul.f32 %v195, %v207
  %v209 = vmul.f32 %v196, %v207
  %v210 = vmax.f32 %v208, 0.0
  %v211 = vmax.f32 %v209, 0.0
  %v212 = vmul.f32 %v167, %v79
  %v213 = vmul.f32 %v169, %v80
  %v214 = vadd.f32 %v212, %v213
  %v215 = vrot.slane %v214, 4
  %v216 = vadd.f32 %v214, %v215
  %v217 = vrot.slane %v216, 2
  %v218 = vadd.f32 %v216, %v217
  %v219 = vrot.slane %v218, 1
  %v220 = vadd.f32 %v218, %v219
  %v221 = vstv %s98
  %v222 = vmul.f32 %v220, %v221
  %v223 = vmul.f32 %v212, %v167
  %v224 = vmul.f32 %v213, %v169
  %v225 = vadd.f32 %v223, %v224
  %v226 = vrot.slane %v225, 4
  %v227 = vadd.f32 %v225, %v226
  %v228 = vrot.slane %v227, 2
  %v229 = vadd.f32 %v227, %v228
  %v230 = vrot.slane %v229, 1
  %v231 = vadd.f32 %v229, %v230
  %v232 = vmul.f32 %v231, %v221
  %v233 = vmul.f32 %v222, %v222
  %v234 = vsub.f32 %v232, %v233
  %v235 = vmax.f32 %v234, 0.0
  %v236 = vsub.f32 %v167, %v222
  %v237 = vsub.f32 %v169, %v222
  %v238 = vadd.f32 %v235, 1e-05
  %v239 = vrsqrt.pop %v238
  %v240 = vmul.f32 %v239, %v238
  %v241 = vmul.f32 %v240, %v239
  %v242 = vmul.f32 0.5, %v241
  %v243 = vsub.f32 1.5, %v242
  %v244 = vmul.f32 %v239, %v243
  %vm245 = vweird.f32 %v238
  %vm246 = vweird.f32 %v239
  %vm247 = vmor %vm245, %vm246
  %v248 = vsel %vm247, %v239, %v244
  %v249 = vmul.f32 %v236, %v248
  %v250 = vmul.f32 %v237, %v248
  %v251 = vmax.f32 %v249, 0.0
  %v252 = vmax.f32 %v250, 0.0
  %v253 = vpack.c.bf16 %v211, %v210
  %v254 = vpack.c.bf16 %v252, %v251
  %v255 = vld [vmem:[%s4] sm:$0xf]
  %v256 = vld [vmem:[%s4 + $0x4] sm:$0xf]
  %v257 = vld [vmem:[%s4 + $0x8] sm:$0xf]
  %v258 = vld [vmem:[%s4 + $0xc] sm:$0xf]
  %v259 = vld [vmem:[%s4 + $0x10] sm:$0xf]
  %v260 = vld [vmem:[%s4 + $0x14] sm:$0xf]
  %v261 = vld [vmem:[%s4 + $0x18] sm:$0xf]
  %v262 = vld [vmem:[%s4 + $0x1c] sm:$0xf]
  %v263 = vld [vmem:[%s4 + $0x20] sm:$0xf]
  %v264 = vld [vmem:[%s4 + $0x24] sm:$0xf]
  %v265 = vld [vmem:[%s4 + $0x28] sm:$0xf]
  %v266 = vld [vmem:[%s4 + $0x2c] sm:$0xf]
  %v267 = vld [vmem:[%s4 + $0x30] sm:$0xf]
  %v268 = vld [vmem:[%s4 + $0x34] sm:$0xf]
  %v269 = vld [vmem:[%s4 + $0x38] sm:$0xf]
  %v270 = vld [vmem:[%s4 + $0x3c] sm:$0xf]
  %v271 = vld [vmem:[%s5] sm:$0x1]
  %v273 = vperm.slane %v271, 0
  %v291 = vunpack.c.l.b16 %v255
  %v292 = vunpack.c.l.b16 %v256
  %v293 = vunpack.c.l.b16 %v257
  %v294 = vunpack.c.l.b16 %v258
  %v295 = vunpack.c.l.b16 %v259
  %v296 = vunpack.c.l.b16 %v260
  %v297 = vunpack.c.l.b16 %v261
  %v298 = vunpack.c.l.b16 %v262
  %v299 = vunpack.c.l.b16 %v263
  %v300 = vunpack.c.l.b16 %v264
  %v301 = vunpack.c.l.b16 %v265
  %v302 = vunpack.c.l.b16 %v266
  %v303 = vunpack.c.l.b16 %v267
  %v304 = vunpack.c.l.b16 %v268
  %v305 = vunpack.c.l.b16 %v269
  %v306 = vunpack.c.l.b16 %v270
  %v307 = vpack.c.b16 %v292, %v291
  %v308 = vpack.c.b16 %v294, %v293
  %v309 = vpack.c.b16 %v296, %v295
  %v310 = vpack.c.b16 %v298, %v297
  %v311 = vpack.c.b16 %v300, %v299
  %v312 = vpack.c.b16 %v302, %v301
  %v313 = vpack.c.b16 %v304, %v303
  %v314 = vpack.c.b16 %v306, %v305
  %323 = vmatpush.bf16.msra.mxu0 %v314
  %324 = vmatpush.bf16.msra.mxu0 %v313
  %325 = vmatpush.bf16.msra.mxu0 %v312
  %326 = vmatpush.bf16.msra.mxu0 %v311
  %327 = vmatpush.bf16.msra.mxu0 %v310
  %328 = vmatpush.bf16.msra.mxu0 %v309
  %329 = vmatpush.bf16.msra.mxu0 %v308
  %330 = vmatpush.bf16.msra.mxu0 %v307
  %331 = vmatmul.bf16.gmra.mxu0 %v253
  %v332 = vpop.f32.mrf.mxu0
  %v333 = vadd.f32 %v273, %v332
  %v334 = vpop.f32.mrf.mxu0
  %v335 = vadd.f32 %v273, %v334
  %336 = vmatmul.bf16.gmra.mxu0 %v254
  %v337 = vpop.f32.mrf.mxu0
  %v338 = vadd.f32 %v273, %v337
  %v339 = vpop.f32.mrf.mxu0
  %v340 = vadd.f32 %v273, %v339
  %341 = vdwg.mxu0
  %v342 = vmul.f32 %v333, %v52
  %v343 = vmul.f32 %v335, %v53
  %vm344 = vcmask 261120
  %v345 = vsel %vm344, %v342, 0.0
  %v346 = vsel %vm344, %v343, 0.0
  %v347 = vadd.f32 %v345, %v346
  %v348 = vrot.slane %v347, 4
  %v349 = vadd.f32 %v347, %v348
  %v350 = vrot.slane %v349, 2
  %v351 = vadd.f32 %v349, %v350
  %v352 = vrot.slane %v351, 1
  %v353 = vadd.f32 %v351, %v352
  %v354 = vmul.f32 %v353, %v180
  %v355 = vmul.f32 %v342, %v333
  %v356 = vmul.f32 %v343, %v335
  %v357 = vsel %vm344, %v355, 0.0
  %v358 = vsel %vm344, %v356, 0.0
  %v359 = vadd.f32 %v357, %v358
  %v360 = vrot.slane %v359, 4
  %v361 = vadd.f32 %v359, %v360
  %v362 = vrot.slane %v361, 2
  %v363 = vadd.f32 %v361, %v362
  %v364 = vrot.slane %v363, 1
  %v365 = vadd.f32 %v363, %v364
  %v366 = vmul.f32 %v365, %v180
  %v367 = vmul.f32 %v354, %v354
  %v368 = vsub.f32 %v366, %v367
  %v369 = vmax.f32 %v368, 0.0
  %v370 = vsub.f32 %v333, %v354
  %v371 = vsub.f32 %v335, %v354
  %v372 = vadd.f32 %v369, 1e-05
  %v373 = vrsqrt.pop %v372
  %v374 = vmul.f32 %v373, %v372
  %v375 = vmul.f32 %v374, %v373
  %v376 = vmul.f32 0.5, %v375
  %v377 = vsub.f32 1.5, %v376
  %v378 = vmul.f32 %v373, %v377
  %vm379 = vweird.f32 %v372
  %vm380 = vweird.f32 %v373
  %vm381 = vmor %vm379, %vm380
  %v382 = vsel %vm381, %v373, %v378
  %v383 = vmul.f32 %v370, %v382
  %v384 = vmul.f32 %v371, %v382
  %v385 = vmax.f32 %v383, 0.0
  %v386 = vmax.f32 %v384, 0.0
  %v387 = vmul.f32 %v338, %v79
  %v388 = vmul.f32 %v340, %v80
  %v389 = vsel %vm344, %v387, 0.0
  %v390 = vsel %vm344, %v388, 0.0
  %v391 = vadd.f32 %v389, %v390
  %v392 = vrot.slane %v391, 4
  %v393 = vadd.f32 %v391, %v392
  %v394 = vrot.slane %v393, 2
  %v395 = vadd.f32 %v393, %v394
  %v396 = vrot.slane %v395, 1
  %v397 = vadd.f32 %v395, %v396
  %v398 = vmul.f32 %v397, %v221
  %v399 = vmul.f32 %v387, %v338
  %v400 = vmul.f32 %v388, %v340
  %v401 = vsel %vm344, %v399, 0.0
  %v402 = vsel %vm344, %v400, 0.0
  %v403 = vadd.f32 %v401, %v402
  %v404 = vrot.slane %v403, 4
  %v405 = vadd.f32 %v403, %v404
  %v406 = vrot.slane %v405, 2
  %v407 = vadd.f32 %v405, %v406
  %v408 = vrot.slane %v407, 1
  %v409 = vadd.f32 %v407, %v408
  %v410 = vmul.f32 %v409, %v221
  %v411 = vmul.f32 %v398, %v398
  %v412 = vsub.f32 %v410, %v411
  %v413 = vmax.f32 %v412, 0.0
  %v414 = vsub.f32 %v338, %v398
  %v415 = vsub.f32 %v340, %v398
  %v416 = vadd.f32 %v413, 1e-05
  %v417 = vrsqrt.pop %v416
  %v418 = vmul.f32 %v417, %v416
  %v419 = vmul.f32 %v418, %v417
  %v420 = vmul.f32 0.5, %v419
  %v421 = vsub.f32 1.5, %v420
  %v422 = vmul.f32 %v417, %v421
  %vm423 = vweird.f32 %v416
  %vm424 = vweird.f32 %v417
  %vm425 = vmor %vm423, %vm424
  %v426 = vsel %vm425, %v417, %v422
  %v427 = vmul.f32 %v414, %v426
  %v428 = vmul.f32 %v415, %v426
  %v429 = vmax.f32 %v427, 0.0
  %v430 = vmax.f32 %v428, 0.0
  %v431 = vld [vmem:[%s6] sm:$0x1]
  %v432 = vpack.c.bf16 %v386, %v385
  %v433 = vpack.c.bf16 %v430, %v429
  %v434 = vld [vmem:[#allocation4] sm:$0x1]
  %436 = vset.pattern.permute.xlu0 0
  %437 = vperm.xlu0 %436, %v434
  %v438 = vpop.permute.xlu0 %437
  %v440 = vperm.slane %v438, 0
  %v442 = vsel %vm344, %v431, 0
  %v445 = vsel %vm344, %v432, 0
  %v448 = vsel %vm344, %v433, 0
  %450 = vmatpush.bf16.xpose.msra.mxu0 0
  %451 = vmatpush.bf16.xpose.msra.mxu0 0
  %452 = vmatpush.bf16.xpose.msra.mxu0 0
  %453 = vmatpush.bf16.xpose.msra.mxu0 0
  %454 = vmatpush.bf16.xpose.msra.mxu0 0
  %455 = vmatpush.bf16.xpose.msra.mxu0 0
  %456 = vmatpush.bf16.xpose.msra.mxu0 %v448
  %457 = vmatpush.bf16.xpose.msra.mxu0 %v445
  %458 = vmatmul.bf16.gmra.mxu0 %v442
  %v459 = vpop.f32.mrf.mxu0
  %v460 = vadd.f32 %v440, %v459
  %v461 = vpop.f32.mrf.mxu0
  %462 = vdwg.mxu0
  %vm463 = vcmask 253952
  %464 = vst.msk [vmem:[%s8] sm:$0x1] %vm463, %v460
  // Predicated region
  $region30: #{extractor_mlp_forward.1} parent=0 // pred_check
    _
  $region31: #{extractor_mlp_forward.1} parent=0 // pred_check_branch
    %466 = sbr.rel (0) target = $region33
  $region32: #{extractor_mlp_forward.1} parent=0 // pred_region
    _
  $region33: #{extractor_mlp_forward.1} parent=0 // pred_fallthru
    _
  // Predicated region
  $region34: #{extractor_mlp_forward.1} parent=0 // pred_check
    _
  $region35: #{extractor_mlp_forward.1} parent=0 // pred_check_branch
    %468 = sbr.rel (0) target = $region37
  $region36: #{extractor_mlp_forward.1} parent=0 // pred_region
    _
  $region37: #{extractor_mlp_forward.1} parent=0 // pred_fallthru
    _

</llo_original>
